<compile_context>
chip_gen: v5e
topology: v5e:2x2
jax: 0.10.0
libtpu: 0.0.40
codegen_flags: <defaults>
</compile_context>

<pallas_src>
import functools

import jax
import jax.numpy as jnp
from jax import lax
from jax.experimental import pallas as pl
from jax.experimental.pallas import tpu as pltpu


def _triplet_kernel(a_ref, b_ref, lab_col_ref, lab_row_ref,
                    invn_col_ref, invn_row_ref, out_ref,
                    pos_min_ref, neg_max_ref,
                    *, margin, n_valid, tile_m, tile_n):
    """Grid step (i, k): anchor row tile i vs embedding column tile k.

    a_ref        : VMEM (TM, D)   bf16 anchor embeddings
    b_ref        : VMEM (TN, D)   bf16 column embeddings
    lab_col_ref  : VMEM (TM, 1)   int32 anchor labels
    lab_row_ref  : VMEM (1, TN)   int32 column labels
    invn_col_ref : VMEM (TM, 1)   f32 anchor 1/||f||
    invn_row_ref : VMEM (1, TN)   f32 column 1/||f||
    out_ref      : VMEM (TM, 128) f32 per-anchor hinge (broadcast across lanes)
    pos_min_ref  : VMEM (TM, 1)   f32 running min similarity over positives
    neg_max_ref  : VMEM (TM, 1)   f32 running max similarity over negatives
    """
    i = pl.program_id(0)
    k = pl.program_id(1)

    POS_BIG = jnp.float32(3.0e38)
    NEG_BIG = jnp.float32(-3.0e38)

    @pl.when(k == 0)
    def _init():
        pos_min_ref[...] = jnp.full_like(pos_min_ref, POS_BIG)
        neg_max_ref[...] = jnp.full_like(neg_max_ref, NEG_BIG)

    # Single-pass bf16 MXU matmul, f32 accumulation (contract over D).
    scores = lax.dot_general(
        a_ref[...], b_ref[...], (((1,), (1,)), ((), ())),
        preferred_element_type=jnp.float32)                       # (TM, TN)

    # Cosine similarity via precomputed reciprocal norms (two VPU broadcasts,
    # no per-element divide).
    sim = scores * invn_col_ref[...] * invn_row_ref[...]

    # Masks built from (TM,1) / (1,TN) iotas; broadcasting does the rest.
    # TODO(synk): specialize the self-exclusion to the diagonal column tile and
    # the valid_col compare to the last (padded) column tile via pl.when.
    row_idx = i * tile_m + lax.broadcasted_iota(jnp.int32, (tile_m, 1), 0)
    col_idx = k * tile_n + lax.broadcasted_iota(jnp.int32, (1, tile_n), 1)
    valid_col = col_idx < n_valid                                  # (1, TN)
    same = lab_col_ref[...] == lab_row_ref[...]                    # (TM, TN)
    pos_mask = same & valid_col & (row_idx != col_idx)
    neg_mask = jnp.logical_not(same) & valid_col

    # Hardest positive = max distance = min similarity; hardest negative =
    # min distance = max similarity ("1 -" hoisted out of the (TM,TN) domain).
    tile_pos_min = jnp.min(jnp.where(pos_mask, sim, POS_BIG),
                           axis=1, keepdims=True)                  # (TM, 1)
    tile_neg_max = jnp.max(jnp.where(neg_mask, sim, NEG_BIG),
                           axis=1, keepdims=True)                  # (TM, 1)
    pos_min_ref[...] = jnp.minimum(pos_min_ref[...], tile_pos_min)
    neg_max_ref[...] = jnp.maximum(neg_max_ref[...], tile_neg_max)

    @pl.when(k == pl.num_programs(1) - 1)
    def _finalize():
        # dap - dan = (1 - pos_min_sim) - (1 - neg_max_sim) = neg_max - pos_min
        hinge = jnp.maximum(
            neg_max_ref[...] - pos_min_ref[...] + jnp.float32(margin), 0.0)
        out_ref[...] = jnp.broadcast_to(hinge, out_ref.shape).astype(out_ref.dtype)


def _round_up(x, m):
    return ((x + m - 1) // m) * m


def triplet_loss(feats, labels, margin=0.7, eps=1e-8):
    """feats: (N, D) embeddings (any float dtype); labels: (N,) int class ids."""
    n, d = feats.shape

    # ---- tile selection ----------------------------------------------------
    if n <= 256:
        n_pad = _round_up(n, 128)
        tm = n_pad // 2           # >= 2 row tiles so both v7x TCs get work
        tn = n_pad
    else:
        tm = 256                  # matches the 256-wide MXU on v6e/v7x
        # Cap the column tile so the double-buffered (TN, D) bf16 block stays
        # well inside every generation's scoped-VMEM budget.
        tn_cap = 1024
        while tn_cap > 256 and tn_cap * d * 2 * 2 > 8 * 1024 * 1024:
            tn_cap //= 2
        tn = min(_round_up(n, 256), tn_cap)
        n_pad = _round_up(n, tn)  # tn is a multiple of tm=256, so tm divides too

    pad = n_pad - n

    feats_f32 = feats.astype(jnp.float32)
    # Cast once in the wrapper; the kernel feeds bf16 straight to the MXU.
    feats_bf = jnp.pad(feats, ((0, pad), (0, 0))).astype(jnp.bfloat16)

    norms = jnp.sqrt(jnp.sum(feats_f32 * feats_f32, axis=1))
    # torch clamps the norm *product* at eps; factoring into per-sample
    # reciprocals clamped at sqrt(eps) is equivalent for any non-degenerate
    # embedding and removes the per-element divide from the kernel.
    inv_norms = 1.0 / jnp.maximum(norms, jnp.float32(eps) ** 0.5)
    inv_norms = jnp.pad(inv_norms, (0, pad)).astype(jnp.float32)

    labels_p = jnp.pad(labels.astype(jnp.int32), (0, pad))
    lab_col = labels_p.reshape(n_pad, 1)
    lab_row = labels_p.reshape(1, n_pad)
    inv_col = inv_norms.reshape(n_pad, 1)
    inv_row = inv_norms.reshape(1, n_pad)

    kernel = functools.partial(
        _triplet_kernel, margin=float(margin), n_valid=int(n),
        tile_m=int(tm), tile_n=int(tn))

    out = pl.pallas_call(
        kernel,
        out_shape=jax.ShapeDtypeStruct((n_pad, 128), jnp.float32),
        grid=(n_pad // tm, n_pad // tn),
        in_specs=[
            pl.BlockSpec((tm, d), lambda i, k: (i, 0)),   # anchor rows (bf16)
            pl.BlockSpec((tn, d), lambda i, k: (k, 0)),   # column tile (bf16)
            pl.BlockSpec((tm, 1), lambda i, k: (i, 0)),   # anchor labels
            pl.BlockSpec((1, tn), lambda i, k: (0, k)),   # column labels
            pl.BlockSpec((tm, 1), lambda i, k: (i, 0)),   # anchor 1/||f||
            pl.BlockSpec((1, tn), lambda i, k: (0, k)),   # column 1/||f||
        ],
        out_specs=pl.BlockSpec((tm, 128), lambda i, k: (i, 0)),
        scratch_shapes=[pltpu.VMEM((tm, 1), jnp.float32),   # running pos min sim
                        pltpu.VMEM((tm, 1), jnp.float32)],  # running neg max sim
        compiler_params=pltpu.CompilerParams(
            dimension_semantics=("parallel", "arbitrary"),
            vmem_limit_bytes=48 * 1024 * 1024),
    )(feats_bf, feats_bf, lab_col, lab_row, inv_col, inv_row)

    hinge = out[:n, 0]                       # per-anchor hinge values
    positive = hinge > 0
    # torch: loss = loss[loss > 0]; loss.mean()  (data-dependent boolean filter
    # stays in JAX; NaN when nothing is > 0, matching an empty tensor's mean()).
    return jnp.sum(jnp.where(positive, hinge, 0.0)) / jnp.sum(
        positive.astype(jnp.float32))


def _reference(feats, labels, margin=0.7, eps=1e-8):
    """Pure-JAX reference mirroring the PyTorch module (selector + forward)."""
    f = feats.astype(jnp.float32)
    nrm = jnp.sqrt(jnp.sum(f * f, axis=1, keepdims=True))
    dots = jnp.dot(f, f.T, precision=jax.lax.Precision.HIGHEST)
    dist = 1.0 - dots / jnp.maximum(nrm * nrm.T, eps)
    n = f.shape[0]
    lb_eq = labels[:, None] == labels[None, :]
    eye = jnp.eye(n, dtype=bool)
    dist_same = jnp.where(lb_eq & ~eye, dist, -jnp.inf)
    pos_idx = jnp.argmax(dist_same, axis=1)
    dist_diff = jnp.where(lb_eq | eye, jnp.inf, dist)
    neg_idx = jnp.argmin(dist_diff, axis=1)
    dap = dist[jnp.arange(n), pos_idx]
    dan = dist[jnp.arange(n), neg_idx]
    hinge = jnp.maximum(dap - dan + margin, 0.0)
    positive = hinge > 0
    return jnp.sum(jnp.where(positive, hinge, 0.0)) / jnp.sum(
        positive.astype(jnp.float32))


if __name__ == "__main__":
    key = jax.random.PRNGKey(0)
    k1, k2 = jax.random.split(key)

    # Small shapes consistent with the module: 16 embeddings of dim 32, 4 classes.
    N, D, n_classes = 16, 32, 4
    feats = jax.random.normal(k1, (N, D), dtype=jnp.float32)
    labels = jnp.tile(jnp.arange(n_classes, dtype=jnp.int32), N // n_classes)

    loss = jax.block_until_ready(triplet_loss(feats, labels, margin=0.7))
    ref = jax.block_until_ready(_reference(feats, labels, margin=0.7))
    # bf16 MXU path vs f32-HIGHEST reference -> loosened tolerance.
    assert jnp.allclose(loss, ref, rtol=5e-2, atol=5e-2), (loss, ref)

    # Second check exercising the multi row/column tiling and the scratch
    # accumulators across the reduction grid axis.
    N2, D2, n_classes2 = 1536, 32, 8
    feats2 = jax.random.normal(k2, (N2, D2), dtype=jnp.float32)
    labels2 = jnp.tile(jnp.arange(n_classes2, dtype=jnp.int32), N2 // n_classes2)
    loss2 = jax.block_until_ready(triplet_loss(feats2, labels2, margin=0.7))
    ref2 = jax.block_until_ready(_reference(feats2, labels2, margin=0.7))
    assert jnp.allclose(loss2, ref2, rtol=5e-2, atol=5e-2), (loss2, ref2)

    print("KERNEL_OK")
</pallas_src>

<mosaic_0001>
module attributes {stable_mosaic.version = 11 : i64} {
  func.func @_triplet_kernel(%arg0: i32, %arg1: i32, %arg2: memref<64x32xbf16, #tpu.memory_space<vmem>>, %arg3: memref<128x32xbf16, #tpu.memory_space<vmem>>, %arg4: memref<64x1xi32, #tpu.memory_space<vmem>>, %arg5: memref<1x128xi32, #tpu.memory_space<vmem>>, %arg6: memref<64x1xf32, #tpu.memory_space<vmem>>, %arg7: memref<1x128xf32, #tpu.memory_space<vmem>>, %arg8: memref<64x128xf32, #tpu.memory_space<vmem>>, %arg9: memref<64x1xf32, #tpu.memory_space<vmem>>, %arg10: memref<64x1xf32, #tpu.memory_space<vmem>>) attributes {dimension_semantics = [#tpu.dimension_semantics<parallel>, #tpu.dimension_semantics<arbitrary>], iteration_bounds = array<i64: 2, 1>, scalar_prefetch = 0 : i64, scratch_operands = 2 : i64, tpu.core_type = #tpu.core_type<tc>, window_params = [{transform_indices = @transform_0, window_bounds = array<i64: 64, 32>}, {transform_indices = @transform_1, window_bounds = array<i64: 128, 32>}, {transform_indices = @transform_2, window_bounds = array<i64: 64, 1>}, {transform_indices = @transform_3, window_bounds = array<i64: 1, 128>}, {transform_indices = @transform_4, window_bounds = array<i64: 64, 1>}, {transform_indices = @transform_5, window_bounds = array<i64: 1, 128>}, {transform_indices = @transform_6, window_bounds = array<i64: 64, 128>}]} {
    %c0_i32 = arith.constant 0 : i32
    %0 = arith.cmpi eq, %arg1, %c0_i32 : i32
    %1 = arith.extui %0 : i1 to i32
    %cst = arith.constant 3.000000e+38 : f32
    %cst_0 = arith.constant -3.000000e+38 : f32
    %c0_i32_1 = arith.constant 0 : i32
    %2 = arith.cmpi ne, %1, %c0_i32_1 : i32
    scf.if %2 {
      %53 = vector.broadcast %cst : f32 to vector<64x1xf32>
      %c0_29 = arith.constant 0 : index
      %c0_30 = arith.constant 0 : index
      %54 = vector.load %arg9[%c0_29, %c0_30] : memref<64x1xf32, #tpu.memory_space<vmem>>, vector<64x1xf32>
      tpu.vector_store %arg9[%c0_29, %c0_30], %53 {strides = array<i32>} : memref<64x1xf32, #tpu.memory_space<vmem>>, vector<64x1xf32>,
      %55 = vector.broadcast %cst_0 : f32 to vector<64x1xf32>
      %c0_31 = arith.constant 0 : index
      %c0_32 = arith.constant 0 : index
      %56 = vector.load %arg10[%c0_31, %c0_32] : memref<64x1xf32, #tpu.memory_space<vmem>>, vector<64x1xf32>
      tpu.vector_store %arg10[%c0_31, %c0_32], %55 {strides = array<i32>} : memref<64x1xf32, #tpu.memory_space<vmem>>, vector<64x1xf32>,
    } else {
    }
    %c0 = arith.constant 0 : index
    %c0_2 = arith.constant 0 : index
    %3 = vector.load %arg2[%c0, %c0_2] : memref<64x32xbf16, #tpu.memory_space<vmem>>, vector<64x32xbf16>
    %c0_3 = arith.constant 0 : index
    %c0_4 = arith.constant 0 : index
    %4 = vector.load %arg3[%c0_3, %c0_4] : memref<128x32xbf16, #tpu.memory_space<vmem>>, vector<128x32xbf16>
    %cst_5 = arith.constant dense<0.000000e+00> : vector<64x128xf32>
    %5 = tpu.matmul %3, %4, %cst_5 {dimension_numbers = #tpu.dot_dimension_numbers<[1], [1], [0], [0], [0, 0, 1, 0], [], []>} : vector<64x32xbf16>, vector<128x32xbf16>, vector<64x128xf32> -> vector<64x128xf32>
    %c0_6 = arith.constant 0 : index
    %c0_7 = arith.constant 0 : index
    %6 = vector.load %arg6[%c0_6, %c0_7] : memref<64x1xf32, #tpu.memory_space<vmem>>, vector<64x1xf32>
    %7 = vector.broadcast %6 : vector<64x1xf32> to vector<64x128xf32>
    %8 = arith.mulf %5, %7 : vector<64x128xf32>
    %c0_8 = arith.constant 0 : index
    %c0_9 = arith.constant 0 : index
    %9 = vector.load %arg7[%c0_8, %c0_9] : memref<1x128xf32, #tpu.memory_space<vmem>>, vector<1x128xf32>
    %10 = vector.broadcast %9 : vector<1x128xf32> to vector<64x128xf32>
    %11 = arith.mulf %8, %10 : vector<64x128xf32>
    %c64_i32 = arith.constant 64 : i32
    %12 = arith.muli %arg0, %c64_i32 : i32
    %13 = tpu.iota {dimensions = array<i32: 0>} : vector<64x1xi32>
    %14 = vector.broadcast %12 : i32 to vector<64x1xi32>
    %15 = arith.addi %14, %13 : vector<64x1xi32>
    %c128_i32 = arith.constant 128 : i32
    %16 = arith.muli %arg1, %c128_i32 : i32
    %17 = tpu.iota {dimensions = array<i32: 1>} : vector<1x128xi32>
    %18 = vector.broadcast %16 : i32 to vector<1x128xi32>
    %19 = arith.addi %18, %17 : vector<1x128xi32>
    %c16_i32 = arith.constant 16 : i32
    %20 = vector.broadcast %c16_i32 : i32 to vector<1x128xi32>
    %21 = arith.cmpi slt, %19, %20 : vector<1x128xi32>
    %c0_10 = arith.constant 0 : index
    %c0_11 = arith.constant 0 : index
    %22 = vector.load %arg4[%c0_10, %c0_11] : memref<64x1xi32, #tpu.memory_space<vmem>>, vector<64x1xi32>
    %c0_12 = arith.constant 0 : index
    %c0_13 = arith.constant 0 : index
    %23 = vector.load %arg5[%c0_12, %c0_13] : memref<1x128xi32, #tpu.memory_space<vmem>>, vector<1x128xi32>
    %24 = vector.broadcast %22 : vector<64x1xi32> to vector<64x128xi32>
    %25 = vector.broadcast %23 : vector<1x128xi32> to vector<64x128xi32>
    %26 = arith.cmpi eq, %24, %25 : vector<64x128xi32>
    %27 = vector.broadcast %21 : vector<1x128xi1> to vector<64x128xi1>
    %28 = arith.andi %26, %27 : vector<64x128xi1>
    %29 = vector.broadcast %15 : vector<64x1xi32> to vector<64x128xi32>
    %30 = vector.broadcast %19 : vector<1x128xi32> to vector<64x128xi32>
    %31 = arith.cmpi ne, %29, %30 : vector<64x128xi32>
    %32 = arith.andi %28, %31 : vector<64x128xi1>
    %cst_14 = arith.constant dense<true> : vector<64x128xi1>
    %33 = arith.xori %26, %cst_14 : vector<64x128xi1>
    %34 = vector.broadcast %21 : vector<1x128xi1> to vector<64x128xi1>
    %35 = arith.andi %33, %34 : vector<64x128xi1>
    %cst_15 = arith.constant 3.000000e+38 : f32
    %36 = vector.broadcast %cst_15 : f32 to vector<64x128xf32>
    %37 = arith.select %32, %11, %36 : vector<64x128xi1>, vector<64x128xf32>
    %cst_16 = arith.constant dense<0x7F800000> : vector<64xf32>
    %38 = vector.multi_reduction <minimumf>, %37, %cst_16 [1] : vector<64x128xf32> to vector<64xf32>
    %39 = vector.shape_cast %38 : vector<64xf32> to vector<64x1xf32>
    %cst_17 = arith.constant -3.000000e+38 : f32
    %40 = vector.broadcast %cst_17 : f32 to vector<64x128xf32>
    %41 = arith.select %35, %11, %40 : vector<64x128xi1>, vector<64x128xf32>
    %cst_18 = arith.constant dense<0xFF800000> : vector<64xf32>
    %42 = vector.multi_reduction <maximumf>, %41, %cst_18 [1] : vector<64x128xf32> to vector<64xf32>
    %43 = vector.shape_cast %42 : vector<64xf32> to vector<64x1xf32>
    %c0_19 = arith.constant 0 : index
    %c0_20 = arith.constant 0 : index
    %44 = vector.load %arg9[%c0_19, %c0_20] : memref<64x1xf32, #tpu.memory_space<vmem>>, vector<64x1xf32>
    %45 = arith.minimumf %44, %39 : vector<64x1xf32>
    %c0_21 = arith.constant 0 : index
    %c0_22 = arith.constant 0 : index
    %46 = vector.load %arg9[%c0_21, %c0_22] : memref<64x1xf32, #tpu.memory_space<vmem>>, vector<64x1xf32>
    tpu.vector_store %arg9[%c0_21, %c0_22], %45 {strides = array<i32>} : memref<64x1xf32, #tpu.memory_space<vmem>>, vector<64x1xf32>,
    %c0_23 = arith.constant 0 : index
    %c0_24 = arith.constant 0 : index
    %47 = vector.load %arg10[%c0_23, %c0_24] : memref<64x1xf32, #tpu.memory_space<vmem>>, vector<64x1xf32>
    %48 = arith.maximumf %47, %43 : vector<64x1xf32>
    %c0_25 = arith.constant 0 : index
    %c0_26 = arith.constant 0 : index
    %49 = vector.load %arg10[%c0_25, %c0_26] : memref<64x1xf32, #tpu.memory_space<vmem>>, vector<64x1xf32>
    tpu.vector_store %arg10[%c0_25, %c0_26], %48 {strides = array<i32>} : memref<64x1xf32, #tpu.memory_space<vmem>>, vector<64x1xf32>,
    %c0_i32_27 = arith.constant 0 : i32
    %50 = arith.cmpi eq, %arg1, %c0_i32_27 : i32
    %51 = arith.extui %50 : i1 to i32
    %c0_i32_28 = arith.constant 0 : i32
    %52 = arith.cmpi ne, %51, %c0_i32_28 : i32
    scf.if %52 {
      %c0_29 = arith.constant 0 : index
      %c0_30 = arith.constant 0 : index
      %53 = vector.load %arg10[%c0_29, %c0_30] : memref<64x1xf32, #tpu.memory_space<vmem>>, vector<64x1xf32>
      %c0_31 = arith.constant 0 : index
      %c0_32 = arith.constant 0 : index
      %54 = vector.load %arg9[%c0_31, %c0_32] : memref<64x1xf32, #tpu.memory_space<vmem>>, vector<64x1xf32>
      %55 = arith.subf %53, %54 : vector<64x1xf32>
      %cst_33 = arith.constant 0.699999988 : f32
      %56 = vector.broadcast %cst_33 : f32 to vector<64x1xf32>
      %57 = arith.addf %55, %56 : vector<64x1xf32>
      %cst_34 = arith.constant 0.000000e+00 : f32
      %58 = vector.broadcast %cst_34 : f32 to vector<64x1xf32>
      %59 = arith.maximumf %57, %58 : vector<64x1xf32>
      %60 = vector.shape_cast %59 : vector<64x1xf32> to vector<64x1xf32>
      %61 = vector.broadcast %60 : vector<64x1xf32> to vector<64x128xf32>
      %c0_35 = arith.constant 0 : index
      %c0_36 = arith.constant 0 : index
      %62 = vector.load %arg8[%c0_35, %c0_36] : memref<64x128xf32, #tpu.memory_space<vmem>>, vector<64x128xf32>
      tpu.vector_store %arg8[%c0_35, %c0_36], %61 {strides = array<i32>} : memref<64x128xf32, #tpu.memory_space<vmem>>, vector<64x128xf32>,
    } else {
    }
    return
  }
  func.func @transform_0(%arg0: i32, %arg1: i32) -> (i32, i32) {
    %c0_i32 = arith.constant 0 : i32
    %c0_i32_0 = arith.constant 0 : i32
    return %arg0, %c0_i32 : i32, i32
  }
  func.func @transform_1(%arg0: i32, %arg1: i32) -> (i32, i32) {
    %c0_i32 = arith.constant 0 : i32
    %c0_i32_0 = arith.constant 0 : i32
    return %arg1, %c0_i32 : i32, i32
  }
  func.func @transform_2(%arg0: i32, %arg1: i32) -> (i32, i32) {
    %c0_i32 = arith.constant 0 : i32
    %c0_i32_0 = arith.constant 0 : i32
    return %arg0, %c0_i32 : i32, i32
  }
  func.func @transform_3(%arg0: i32, %arg1: i32) -> (i32, i32) {
    %c0_i32 = arith.constant 0 : i32
    %c0_i32_0 = arith.constant 0 : i32
    return %c0_i32, %arg1 : i32, i32
  }
  func.func @transform_4(%arg0: i32, %arg1: i32) -> (i32, i32) {
    %c0_i32 = arith.constant 0 : i32
    %c0_i32_0 = arith.constant 0 : i32
    return %arg0, %c0_i32 : i32, i32
  }
  func.func @transform_5(%arg0: i32, %arg1: i32) -> (i32, i32) {
    %c0_i32 = arith.constant 0 : i32
    %c0_i32_0 = arith.constant 0 : i32
    return %c0_i32, %arg1 : i32, i32
  }
  func.func @transform_6(%arg0: i32, %arg1: i32) -> (i32, i32) {
    %c0_i32 = arith.constant 0 : i32
    %c0_i32_0 = arith.constant 0 : i32
    return %arg0, %c0_i32 : i32, i32
  }
}

</mosaic_0001>

<llo_original>
// kernel: tpu_custom_call.1
$region0: #{tpu_custom_call.1}
  #allocation0 [shape = 'u32[]', space=smem, size = 0x4, offset = 0x4, fixed_abs, tag = 'smem constant byte address 0x4 - core index']
  #allocation1 [shape = 'u32[72,128]{1,0:T(1,128)}', space=vmem, size = 0x9000, scoped, tag = 'internal scratch']
  #allocation2 [shape = 'f32[64,1]{1,0:T(8,128)}', space=vmem, size = 0x8000, scoped, tag = 'scratch operand']
  #allocation3 [shape = 'f32[64,1]{1,0:T(8,128)}', space=vmem, size = 0x8000, scoped, tag = 'scratch operand']
  %s0 = inlined_call_operand.vmem [shape: bf16[128,32], index: 0, kind: input, shape index: {}]
  %s1 = inlined_call_operand.vmem [shape: bf16[128,32], index: 1, kind: input, shape index: {}]
  %s2 = inlined_call_operand.vmem [shape: s32[128,1], index: 2, kind: input, shape index: {}]
  %s3 = inlined_call_operand.vmem [shape: s32[1,128], index: 3, kind: input, shape index: {}]
  %s4 = inlined_call_operand.vmem [shape: f32[128,1], index: 4, kind: input, shape index: {}]
  %s5 = inlined_call_operand.vmem [shape: f32[1,128], index: 5, kind: input, shape index: {}]
  %s6 = inlined_call_operand.hbm [shape: f32[128,128], index: 6, kind: output, shape index: {}]
  %s7 = sld [smem:[#allocation0]]
  $region65: #{tpu_custom_call.1} parent=0
    _
  %s9 = ssub.s32 1, %s7
  %s10 = scalar_select 0, %s9, %s7
  $region1: #{tpu_custom_call.1} parent=0
    #allocation4 [shape = 'u8[65536]{0}', space=vmem, size = 0x10000, scoped, tag = 'output window, operand 0']
    #allocation5 [shape = 's32[2]{0}', space=sflag, size = 0x8, scoped, tag = 'scoped memory for tpu_custom_call.1']
    %11 = vsyncpa [#allocation5], 0
    %s12 = scalar_lea.sflag [#allocation5], 1
    %13 = vsyncpa %s12, 0
    loop: start=0, step=1, limit=4
    $region2: #{tpu_custom_call.1} parent=1 // loop_pre_header
      _
    $region3: #{tpu_custom_call.1} parent=1 // loop_header
      %s15 = sphi 0, %s19
      %p16 = scmp.ge.s32.totalorder %s15, 4
      %s22 = sphi 0, %s34
      %s23 = sphi 0, %s30
      %s24 = sphi 0, %s22
      %s25 = sphi 0, %s23
      %s26 = sphi 0, %s24
      %s27 = sphi 0, %s25
      %s37 = sphi 0, %s39
      %s40 = sphi 0, %s37
      %s41 = sphi 0, %s40
      %s57 = sphi 0, %s41
      %s63 = sphi 0, %s65
      %s66 = sphi 0, %s63
      %s67 = sphi 0, %s66
      %s83 = sphi 0, %s67
      %s89 = sphi 0, %s91
      %s92 = sphi 0, %s89
      %s93 = sphi 0, %s92
      %s109 = sphi 0, %s93
      %s115 = sphi 0, %s117
      %s118 = sphi 0, %s115
      %s119 = sphi 0, %s118
      %s135 = sphi 0, %s119
      %s141 = sphi 0, %s143
      %s144 = sphi 0, %s141
      %s145 = sphi 0, %s144
      %s161 = sphi 0, %s145
      %s167 = sphi 0, %s169
      %s170 = sphi 0, %s167
      %s171 = sphi 0, %s170
      %s187 = sphi 0, %s171
      %s193 = sphi 0, %s195
      %s196 = sphi 0, %s193
      %s197 = sphi 0, %s196
      %s213 = sphi 0, %s197
    $region4: #{tpu_custom_call.1} parent=1 // loop_header_branch
      %18 = sbr.rel (%p16) target = $region8
    $region5: #{tpu_custom_call.1} parent=1 // loop_body
      %s20 = ssub.s32 %s15, 1
      %s21 = ssub.s32 %s15, 2
      %s28 = sadd.s32 1, %s23
      %p29 = scmp.ge.s32.totalorder %s28, 1
      %s30 = scalar_select %p29, 0, %s28
      %s31 = sadd.s32 1, %s22
      %s32 = scalar_select %p29, %s31, %s22
      %p33 = scmp.ge.s32.totalorder %s32, 2
      %s34 = scalar_select %p33, 0, %s32
      %s35 = ssub.s32 %s22, %s34
      %p36 = scmp.eq.s32.totalorder %s35, 0
      %s38 = sadd.s32 %s37, 1
      %s39 = scalar_select %p36, %s37, %s38
      %p42 = pneg %p36
      %p43 = scmp.eq.s32.totalorder %s15, 1
      %p44 = por %p42, %p43
      %p45 = scmp.ne.s32.totalorder %s37, %s40
      %p46 = scmp.eq.s32.totalorder %s15, 0
      %p47 = por %p45, %p46
      %p48 = scmp.ne.s32.totalorder %s37, %s40
      %p49 = scmp.eq.s32.totalorder %s20, 1
      %p50 = por %p48, %p49
      %p51 = scmp.ne.s32.totalorder %s40, %s41
      %p52 = scmp.eq.s32.totalorder %s20, 0
      %p53 = por %p51, %p52
      %p54 = scmp.ne.s32.totalorder %s40, %s41
      %p55 = scmp.eq.s32.totalorder %s21, 1
      %p56 = por %p54, %p55
      %p58 = scmp.ne.s32.totalorder %s41, %s57
      %p59 = scmp.eq.s32.totalorder %s21, 0
      %p60 = por %p58, %p59
      %s61 = ssub.s32 %s23, %s30
      %p62 = scmp.eq.s32.totalorder %s61, 0
      %s64 = sadd.s32 %s63, 1
      %s65 = scalar_select %p62, %s63, %s64
      %p68 = pneg %p62
      %p69 = scmp.eq.s32.totalorder %s15, 1
      %p70 = por %p68, %p69
      %p71 = scmp.ne.s32.totalorder %s63, %s66
      %p72 = scmp.eq.s32.totalorder %s15, 0
      %p73 = por %p71, %p72
      %p74 = scmp.ne.s32.totalorder %s63, %s66
      %p75 = scmp.eq.s32.totalorder %s20, 1
      %p76 = por %p74, %p75
      %p77 = scmp.ne.s32.totalorder %s66, %s67
      %p78 = scmp.eq.s32.totalorder %s20, 0
      %p79 = por %p77, %p78
      %p80 = scmp.ne.s32.totalorder %s66, %s67
      %p81 = scmp.eq.s32.totalorder %s21, 1
      %p82 = por %p80, %p81
      %p84 = scmp.ne.s32.totalorder %s67, %s83
      %p85 = scmp.eq.s32.totalorder %s21, 0
      %p86 = por %p84, %p85
      %s87 = ssub.s32 %s22, %s34
      %p88 = scmp.eq.s32.totalorder %s87, 0
      %s90 = sadd.s32 %s89, 1
      %s91 = scalar_select %p88, %s89, %s90
      %p94 = pneg %p88
      %p95 = scmp.eq.s32.totalorder %s15, 1
      %p96 = por %p94, %p95
      %p97 = scmp.ne.s32.totalorder %s89, %s92
      %p98 = scmp.eq.s32.totalorder %s15, 0
      %p99 = por %p97, %p98
      %p100 = scmp.ne.s32.totalorder %s89, %s92
      %p101 = scmp.eq.s32.totalorder %s20, 1
      %p102 = por %p100, %p101
      %p103 = scmp.ne.s32.totalorder %s92, %s93
      %p104 = scmp.eq.s32.totalorder %s20, 0
      %p105 = por %p103, %p104
      %p106 = scmp.ne.s32.totalorder %s92, %s93
      %p107 = scmp.eq.s32.totalorder %s21, 1
      %p108 = por %p106, %p107
      %p110 = scmp.ne.s32.totalorder %s93, %s109
      %p111 = scmp.eq.s32.totalorder %s21, 0
      %p112 = por %p110, %p111
      %s113 = ssub.s32 %s23, %s30
      %p114 = scmp.eq.s32.totalorder %s113, 0
      %s116 = sadd.s32 %s115, 1
      %s117 = scalar_select %p114, %s115, %s116
      %p120 = pneg %p114
      %p121 = scmp.eq.s32.totalorder %s15, 1
      %p122 = por %p120, %p121
      %p123 = scmp.ne.s32.totalorder %s115, %s118
      %p124 = scmp.eq.s32.totalorder %s15, 0
      %p125 = por %p123, %p124
      %p126 = scmp.ne.s32.totalorder %s115, %s118
      %p127 = scmp.eq.s32.totalorder %s20, 1
      %p128 = por %p126, %p127
      %p129 = scmp.ne.s32.totalorder %s118, %s119
      %p130 = scmp.eq.s32.totalorder %s20, 0
      %p131 = por %p129, %p130
      %p132 = scmp.ne.s32.totalorder %s118, %s119
      %p133 = scmp.eq.s32.totalorder %s21, 1
      %p134 = por %p132, %p133
      %p136 = scmp.ne.s32.totalorder %s119, %s135
      %p137 = scmp.eq.s32.totalorder %s21, 0
      %p138 = por %p136, %p137
      %s139 = ssub.s32 %s22, %s34
      %p140 = scmp.eq.s32.totalorder %s139, 0
      %s142 = sadd.s32 %s141, 1
      %s143 = scalar_select %p140, %s141, %s142
      %p146 = pneg %p140
      %p147 = scmp.eq.s32.totalorder %s15, 1
      %p148 = por %p146, %p147
      %p149 = scmp.ne.s32.totalorder %s141, %s144
      %p150 = scmp.eq.s32.totalorder %s15, 0
      %p151 = por %p149, %p150
      %p152 = scmp.ne.s32.totalorder %s141, %s144
      %p153 = scmp.eq.s32.totalorder %s20, 1
      %p154 = por %p152, %p153
      %p155 = scmp.ne.s32.totalorder %s144, %s145
      %p156 = scmp.eq.s32.totalorder %s20, 0
      %p157 = por %p155, %p156
      %p158 = scmp.ne.s32.totalorder %s144, %s145
      %p159 = scmp.eq.s32.totalorder %s21, 1
      %p160 = por %p158, %p159
      %p162 = scmp.ne.s32.totalorder %s145, %s161
      %p163 = scmp.eq.s32.totalorder %s21, 0
      %p164 = por %p162, %p163
      %s165 = ssub.s32 %s23, %s30
      %p166 = scmp.eq.s32.totalorder %s165, 0
      %s168 = sadd.s32 %s167, 1
      %s169 = scalar_select %p166, %s167, %s168
      %p172 = pneg %p166
      %p173 = scmp.eq.s32.totalorder %s15, 1
      %p174 = por %p172, %p173
      %p175 = scmp.ne.s32.totalorder %s167, %s170
      %p176 = scmp.eq.s32.totalorder %s15, 0
      %p177 = por %p175, %p176
      %p178 = scmp.ne.s32.totalorder %s167, %s170
      %p179 = scmp.eq.s32.totalorder %s20, 1
      %p180 = por %p178, %p179
      %p181 = scmp.ne.s32.totalorder %s170, %s171
      %p182 = scmp.eq.s32.totalorder %s20, 0
      %p183 = por %p181, %p182
      %p184 = scmp.ne.s32.totalorder %s170, %s171
      %p185 = scmp.eq.s32.totalorder %s21, 1
      %p186 = por %p184, %p185
      %p188 = scmp.ne.s32.totalorder %s171, %s187
      %p189 = scmp.eq.s32.totalorder %s21, 0
      %p190 = por %p188, %p189
      %s191 = ssub.s32 %s22, %s34
      %p192 = scmp.eq.s32.totalorder %s191, 0
      %s194 = sadd.s32 %s193, 1
      %s195 = scalar_select %p192, %s193, %s194
      %p198 = pneg %p192
      %p199 = scmp.eq.s32.totalorder %s15, 1
      %p200 = por %p198, %p199
      %p201 = scmp.ne.s32.totalorder %s193, %s196
      %p202 = scmp.eq.s32.totalorder %s15, 0
      %p203 = por %p201, %p202
      %p204 = scmp.ne.s32.totalorder %s193, %s196
      %p205 = scmp.eq.s32.totalorder %s20, 1
      %p206 = por %p204, %p205
      %p207 = scmp.ne.s32.totalorder %s196, %s197
      %p208 = scmp.eq.s32.totalorder %s20, 0
      %p209 = por %p207, %p208
      %p210 = scmp.ne.s32.totalorder %s196, %s197
      %p211 = scmp.eq.s32.totalorder %s21, 1
      %p212 = por %p210, %p211
      %p214 = scmp.ne.s32.totalorder %s197, %s213
      %p215 = scmp.eq.s32.totalorder %s21, 0
      %p216 = por %p214, %p215
      %p217 = scmp.le.s32.totalorder 1, %s15
      %p218 = scmp.lt.s32.totalorder %s15, 3
      %p219 = pnand %p217, %p218
      %p220 = pneg %p219
      // Predicated region
      $region9: #{tpu_custom_call.1} parent=5 // pred_check
        _
      $region10: #{tpu_custom_call.1} parent=5 // pred_check_branch
        %222 = sbr.rel (%p219) target = $region12
      $region11: #{tpu_custom_call.1} parent=5 // pred_region
        %s223 = ssub.s32 %s15, 1
        // Predicated region
        $region13: #{tpu_custom_call.1} parent=11 // pred_check
          %p224 = pneg %p79
        $region14: #{tpu_custom_call.1} parent=11 // pred_check_branch
          %226 = sbr.rel (%p224) target = $region16
        $region15: #{tpu_custom_call.1} parent=11 // pred_region
          %s227 = smul.u32 16, %s25
          %p228 = scmp.lt.s32.totalorder %s227, 15
          %s229 = scalar_select %p228, %s227, 15
          %s230 = smul.addr %s229, 4
          %s231 = scalar_lea.vmem %s1, %s230
          %s232 = smul.u32 16, %s25
        $region16: #{tpu_custom_call.1} parent=11 // pred_fallthru
          _
        // Predicated region
        $region17: #{tpu_custom_call.1} parent=11 // pred_check
          %p233 = pneg %p131
        $region18: #{tpu_custom_call.1} parent=11 // pred_check_branch
          %235 = sbr.rel (%p233) target = $region20
        $region19: #{tpu_custom_call.1} parent=11 // pred_region
          %p236 = scmp.lt.s32.totalorder %s25, 0
          %s237 = scalar_select %p236, %s25, 0
          %s238 = scalar_lea.vmem %s3, %s237
        $region20: #{tpu_custom_call.1} parent=11 // pred_fallthru
          _
        // Predicated region
        $region21: #{tpu_custom_call.1} parent=11 // pred_check
          %p239 = pneg %p183
        $region22: #{tpu_custom_call.1} parent=11 // pred_check_branch
          %241 = sbr.rel (%p239) target = $region24
        $region23: #{tpu_custom_call.1} parent=11 // pred_region
          %p242 = scmp.lt.s32.totalorder %s25, 0
          %s243 = scalar_select %p242, %s25, 0
          %s244 = scalar_lea.vmem %s5, %s243
        $region24: #{tpu_custom_call.1} parent=11 // pred_fallthru
          _
      $region12: #{tpu_custom_call.1} parent=5 // pred_fallthru
        _
      %p245 = scmp.lt.s32.totalorder %s15, 2
      // Predicated region
      $region25: #{tpu_custom_call.1} parent=5 // pred_check
        %p246 = pneg %p245
      $region26: #{tpu_custom_call.1} parent=5 // pred_check_branch
        %248 = sbr.rel (%p246) target = $region28
      $region27: #{tpu_custom_call.1} parent=5 // pred_region
        // Predicated region
        $region29: #{tpu_custom_call.1} parent=27 // pred_check
          %p249 = pneg %p47
        $region30: #{tpu_custom_call.1} parent=27 // pred_check_branch
          %251 = sbr.rel (%p249) target = $region32
        $region31: #{tpu_custom_call.1} parent=27 // pred_region
          %s252 = smul.u32 8, %s22
          %p253 = scmp.lt.s32.totalorder %s252, 15
          %s254 = scalar_select %p253, %s252, 15
          %s255 = smul.addr %s254, 4
          %s256 = scalar_lea.vmem %s0, %s255
          %s257 = smul.u32 8, %s22
        $region32: #{tpu_custom_call.1} parent=27 // pred_fallthru
          _
        // Predicated region
        $region33: #{tpu_custom_call.1} parent=27 // pred_check
          %p258 = pneg %p99
        $region34: #{tpu_custom_call.1} parent=27 // pred_check_branch
          %260 = sbr.rel (%p258) target = $region36
        $region35: #{tpu_custom_call.1} parent=27 // pred_region
          %s261 = smul.u32 8, %s22
          %p262 = scmp.lt.s32.totalorder %s261, 15
          %s263 = scalar_select %p262, %s261, 15
          %s264 = smul.addr %s263, 8
          %s265 = scalar_lea.vmem %s2, %s264
          %s266 = smul.u32 8, %s22
        $region36: #{tpu_custom_call.1} parent=27 // pred_fallthru
          _
        // Predicated region
        $region37: #{tpu_custom_call.1} parent=27 // pred_check
          %p267 = pneg %p151
        $region38: #{tpu_custom_call.1} parent=27 // pred_check_branch
          %269 = sbr.rel (%p267) target = $region40
        $region39: #{tpu_custom_call.1} parent=27 // pred_region
          %s270 = smul.u32 8, %s22
          %p271 = scmp.lt.s32.totalorder %s270, 15
          %s272 = scalar_select %p271, %s270, 15
          %s273 = smul.addr %s272, 8
          %s274 = scalar_lea.vmem %s4, %s273
          %s275 = smul.u32 8, %s22
        $region40: #{tpu_custom_call.1} parent=27 // pred_fallthru
          _
      $region28: #{tpu_custom_call.1} parent=5 // pred_fallthru
        _
      %p276 = scmp.le.s32.totalorder 1, %s15
      %p277 = scmp.lt.s32.totalorder %s15, 3
      %p278 = pnand %p276, %p277
      %p279 = pneg %p278
      // Predicated region
      $region41: #{tpu_custom_call.1} parent=5 // pred_check
        _
      $region42: #{tpu_custom_call.1} parent=5 // pred_check_branch
        %281 = sbr.rel (%p278) target = $region44
      $region43: #{tpu_custom_call.1} parent=5 // pred_region
        %s282 = ssub.s32 %s15, 1
        %s283 = smul.u32 8, %s24
        %p284 = scmp.lt.s32.totalorder %s283, 15
        %s285 = scalar_select %p284, %s283, 15
        %s286 = smul.addr %s285, 4
        %s287 = scalar_lea.vmem %s0, %s286
        %p288 = pneg %p53
        %p289 = pneg %p50
        %s290 = smul.u32 16, %s25
        %p291 = scmp.lt.s32.totalorder %s290, 15
        %s292 = scalar_select %p291, %s290, 15
        %s293 = smul.addr %s292, 4
        %s294 = scalar_lea.vmem %s1, %s293
        %p295 = pneg %p79
        %p296 = pneg %p76
        %s297 = smul.u32 8, %s24
        %p298 = scmp.lt.s32.totalorder %s297, 15
        %s299 = scalar_select %p298, %s297, 15
        %s300 = smul.addr %s299, 8
        %s301 = scalar_lea.vmem %s2, %s300
        %p302 = pneg %p105
        %p303 = pneg %p102
        %p304 = scmp.lt.s32.totalorder %s25, 0
        %s305 = scalar_select %p304, %s25, 0
        %s306 = scalar_lea.vmem %s3, %s305
        %p307 = pneg %p131
        %p308 = pneg %p128
        %s309 = smul.u32 8, %s24
        %p310 = scmp.lt.s32.totalorder %s309, 15
        %s311 = scalar_select %p310, %s309, 15
        %s312 = smul.addr %s311, 8
        %s313 = scalar_lea.vmem %s4, %s312
        %p314 = pneg %p157
        %p315 = pneg %p154
        %p316 = scmp.lt.s32.totalorder %s25, 0
        %s317 = scalar_select %p316, %s25, 0
        %s318 = scalar_lea.vmem %s5, %s317
        %p319 = pneg %p183
        %p320 = pneg %p180
        %p321 = pneg %p209
        %p322 = pneg %p206
        %s323 = sand.u32 %s196, 1
        %s324 = scalar_lea.sflag [#allocation5], %s323
        %s325 = sand.u32 %s196, 1
        %s326 = smul.addr %s325, 64
        %s327 = scalar_lea.vmem [#allocation4], %s326
        %s328 = smul.u32 8, %s24
        %p329 = scmp.lt.s32.totalorder %s328, 15
        %s330 = scalar_select %p329, %s328, 15
        %s331 = smul.addr %s330, 4
        %s332 = scalar_lea.vmem %s0, %s331
        %s333 = smul.u32 8, %s24
        %s334 = smul.u32 16, %s25
        %p335 = scmp.lt.s32.totalorder %s334, 15
        %s336 = scalar_select %p335, %s334, 15
        %s337 = smul.addr %s336, 4
        %s338 = scalar_lea.vmem %s1, %s337
        %s339 = smul.u32 16, %s25
        %s340 = smul.u32 8, %s24
        %p341 = scmp.lt.s32.totalorder %s340, 15
        %s342 = scalar_select %p341, %s340, 15
        %s343 = smul.addr %s342, 8
        %s344 = scalar_lea.vmem %s2, %s343
        %s345 = smul.u32 8, %s24
        %p346 = scmp.lt.s32.totalorder %s25, 0
        %s347 = scalar_select %p346, %s25, 0
        %s348 = scalar_lea.vmem %s3, %s347
        %s349 = smul.u32 8, %s24
        %p350 = scmp.lt.s32.totalorder %s349, 15
        %s351 = scalar_select %p350, %s349, 15
        %s352 = smul.addr %s351, 8
        %s353 = scalar_lea.vmem %s4, %s352
        %s354 = smul.u32 8, %s24
        %p355 = scmp.lt.s32.totalorder %s25, 0
        %s356 = scalar_select %p355, %s25, 0
        %s357 = scalar_lea.vmem %s5, %s356
        %s358 = smul.u32 8, %s24
        %p359 = scmp.eq.s32.totalorder %s25, 0
        // Predicated region
        $region45: #{tpu_custom_call.1} parent=43 // pred_check
          %p360 = pneg %p359
        $region46: #{tpu_custom_call.1} parent=43 // pred_check_branch
          %362 = sbr.rel (%p360) target = $region48
        $region47: #{tpu_custom_call.1} parent=43 // pred_region
          %vm363 = vcmask 7168
          %364 = vst.msk [vmem:[#allocation2] sm:$0xff] %vm363, 3e+38
          %365 = vst.msk [vmem:[#allocation2 + $0x8] sm:$0xff] %vm363, 3e+38
          %366 = vst.msk [vmem:[#allocation2 + $0x10] sm:$0xff] %vm363, 3e+38
          %367 = vst.msk [vmem:[#allocation2 + $0x18] sm:$0xff] %vm363, 3e+38
          %368 = vst.msk [vmem:[#allocation2 + $0x20] sm:$0xff] %vm363, 3e+38
          %369 = vst.msk [vmem:[#allocation2 + $0x28] sm:$0xff] %vm363, 3e+38
          %370 = vst.msk [vmem:[#allocation2 + $0x30] sm:$0xff] %vm363, 3e+38
          %371 = vst.msk [vmem:[#allocation2 + $0x38] sm:$0xff] %vm363, 3e+38
          %372 = vst.msk [vmem:[#allocation3] sm:$0xff] %vm363, -3e+38
          %373 = vst.msk [vmem:[#allocation3 + $0x8] sm:$0xff] %vm363, -3e+38
          %374 = vst.msk [vmem:[#allocation3 + $0x10] sm:$0xff] %vm363, -3e+38
          %375 = vst.msk [vmem:[#allocation3 + $0x18] sm:$0xff] %vm363, -3e+38
          %376 = vst.msk [vmem:[#allocation3 + $0x20] sm:$0xff] %vm363, -3e+38
          %377 = vst.msk [vmem:[#allocation3 + $0x28] sm:$0xff] %vm363, -3e+38
          %378 = vst.msk [vmem:[#allocation3 + $0x30] sm:$0xff] %vm363, -3e+38
          %379 = vst.msk [vmem:[#allocation3 + $0x38] sm:$0xff] %vm363, -3e+38
        $region48: #{tpu_custom_call.1} parent=43 // pred_fallthru
          _
        %v380 = vld [vmem:[%s332] sm:$0xf]
        %v381 = vld [vmem:[%s332 + $0x4] sm:$0xf]
        %v382 = vld [vmem:[%s332 + $0x8] sm:$0xf]
        %v383 = vld [vmem:[%s332 + $0xc] sm:$0xf]
        %v384 = vld [vmem:[%s332 + $0x10] sm:$0xf]
        %v385 = vld [vmem:[%s332 + $0x14] sm:$0xf]
        %v386 = vld [vmem:[%s332 + $0x18] sm:$0xf]
        %v387 = vld [vmem:[%s332 + $0x1c] sm:$0xf]
        %v388 = vld [vmem:[%s338] sm:$0xf]
        %v389 = vld [vmem:[%s338 + $0x4] sm:$0xf]
        %v390 = vld [vmem:[%s338 + $0x8] sm:$0xf]
        %v391 = vld [vmem:[%s338 + $0xc] sm:$0xf]
        %v392 = vld [vmem:[%s338 + $0x10] sm:$0xf]
        %v393 = vld [vmem:[%s338 + $0x14] sm:$0xf]
        %v394 = vld [vmem:[%s338 + $0x18] sm:$0xf]
        %v395 = vld [vmem:[%s338 + $0x1c] sm:$0xf]
        %v396 = vld [vmem:[%s338 + $0x20] sm:$0xf]
        %v397 = vld [vmem:[%s338 + $0x24] sm:$0xf]
        %v398 = vld [vmem:[%s338 + $0x28] sm:$0xf]
        %v399 = vld [vmem:[%s338 + $0x2c] sm:$0xf]
        %v400 = vld [vmem:[%s338 + $0x30] sm:$0xf]
        %v401 = vld [vmem:[%s338 + $0x34] sm:$0xf]
        %v402 = vld [vmem:[%s338 + $0x38] sm:$0xf]
        %v403 = vld [vmem:[%s338 + $0x3c] sm:$0xf]
        %v412 = vunpack.c.l.b16 %v380
        %v413 = vunpack.c.l.b16 %v381
        %v414 = vunpack.c.l.b16 %v382
        %v415 = vunpack.c.l.b16 %v383
        %v416 = vunpack.c.l.b16 %v384
        %v417 = vunpack.c.l.b16 %v385
        %v418 = vunpack.c.l.b16 %v386
        %v419 = vunpack.c.l.b16 %v387
        %v420 = vpack.c.b16 %v413, %v412
        %v421 = vpack.c.b16 %v415, %v414
        %v422 = vpack.c.b16 %v417, %v416
        %v423 = vpack.c.b16 %v419, %v418
        %v440 = vunpack.c.l.b16 %v388
        %v441 = vunpack.c.l.b16 %v389
        %v442 = vunpack.c.l.b16 %v390
        %v443 = vunpack.c.l.b16 %v391
        %v444 = vunpack.c.l.b16 %v392
        %v445 = vunpack.c.l.b16 %v393
        %v446 = vunpack.c.l.b16 %v394
        %v447 = vunpack.c.l.b16 %v395
        %v448 = vunpack.c.l.b16 %v396
        %v449 = vunpack.c.l.b16 %v397
        %v450 = vunpack.c.l.b16 %v398
        %v451 = vunpack.c.l.b16 %v399
        %v452 = vunpack.c.l.b16 %v400
        %v453 = vunpack.c.l.b16 %v401
        %v454 = vunpack.c.l.b16 %v402
        %v455 = vunpack.c.l.b16 %v403
        %v456 = vpack.c.b16 %v441, %v440
        %v457 = vpack.c.b16 %v443, %v442
        %v458 = vpack.c.b16 %v445, %v444
        %v459 = vpack.c.b16 %v447, %v446
        %v460 = vpack.c.b16 %v449, %v448
        %v461 = vpack.c.b16 %v451, %v450
        %v462 = vpack.c.b16 %v453, %v452
        %v463 = vpack.c.b16 %v455, %v454
        %vm464 = vcmask 261120
        %v466 = vsel %vm464, %v420, 0
        %v469 = vsel %vm464, %v421, 0
        %v472 = vsel %vm464, %v422, 0
        %v475 = vsel %vm464, %v423, 0
        %v478 = vsel %vm464, %v456, 0
        %v481 = vsel %vm464, %v457, 0
        %v484 = vsel %vm464, %v458, 0
        %v487 = vsel %vm464, %v459, 0
        %v490 = vsel %vm464, %v460, 0
        %v493 = vsel %vm464, %v461, 0
        %v496 = vsel %vm464, %v462, 0
        %v499 = vsel %vm464, %v463, 0
        %501 = vmatpush.bf16.xpose.msra.mxu0 %v499
        %502 = vmatpush.bf16.xpose.msra.mxu0 %v496
        %503 = vmatpush.bf16.xpose.msra.mxu0 %v493
        %504 = vmatpush.bf16.xpose.msra.mxu0 %v490
        %505 = vmatpush.bf16.xpose.msra.mxu0 %v487
        %506 = vmatpush.bf16.xpose.msra.mxu0 %v484
        %507 = vmatpush.bf16.xpose.msra.mxu0 %v481
        %508 = vmatpush.bf16.xpose.msra.mxu0 %v478
        %509 = vmatmul.bf16.gmra.mxu0 %v466
        %v510 = vpop.f32.mrf.mxu0
        %v511 = vadd.f32 0.0, %v510
        %v512 = vpop.f32.mrf.mxu0
        %v513 = vadd.f32 0.0, %v512
        %514 = vmatmul.bf16.gmra.mxu0 %v469
        %v515 = vpop.f32.mrf.mxu0
        %v516 = vadd.f32 0.0, %v515
        %v517 = vpop.f32.mrf.mxu0
        %v518 = vadd.f32 0.0, %v517
        %519 = vmatmul.bf16.gmra.mxu0 %v472
        %v520 = vpop.f32.mrf.mxu0
        %v521 = vadd.f32 0.0, %v520
        %v522 = vpop.f32.mrf.mxu0
        %v523 = vadd.f32 0.0, %v522
        %524 = vmatmul.bf16.gmra.mxu0 %v475
        %v525 = vpop.f32.mrf.mxu0
        %v526 = vadd.f32 0.0, %v525
        %v527 = vpop.f32.mrf.mxu0
        %v528 = vadd.f32 0.0, %v527
        %529 = vdwg.mxu0
        %v530 = vld [vmem:[%s353] sm:$0xff]
        %v531 = vld [vmem:[%s353 + $0x8] sm:$0xff]
        %v532 = vld [vmem:[%s353 + $0x10] sm:$0xff]
        %v533 = vld [vmem:[%s353 + $0x18] sm:$0xff]
        %v534 = vld [vmem:[%s353 + $0x20] sm:$0xff]
        %v535 = vld [vmem:[%s353 + $0x28] sm:$0xff]
        %v536 = vld [vmem:[%s353 + $0x30] sm:$0xff]
        %v537 = vld [vmem:[%s353 + $0x38] sm:$0xff]
        %539 = vset.pattern.permute.xlu0 0
        %540 = vperm.xlu0 %539, %v530
        %v541 = vpop.permute.xlu0 %540
        %544 = vset.pattern.permute.xlu0 0
        %545 = vperm.xlu0 %544, %v531
        %v546 = vpop.permute.xlu0 %545
        %549 = vset.pattern.permute.xlu0 0
        %550 = vperm.xlu0 %549, %v532
        %v551 = vpop.permute.xlu0 %550
        %554 = vset.pattern.permute.xlu0 0
        %555 = vperm.xlu0 %554, %v533
        %v556 = vpop.permute.xlu0 %555
        %559 = vset.pattern.permute.xlu0 0
        %560 = vperm.xlu0 %559, %v534
        %v561 = vpop.permute.xlu0 %560
        %564 = vset.pattern.permute.xlu0 0
        %565 = vperm.xlu0 %564, %v535
        %v566 = vpop.permute.xlu0 %565
        %569 = vset.pattern.permute.xlu0 0
        %570 = vperm.xlu0 %569, %v536
        %v571 = vpop.permute.xlu0 %570
        %574 = vset.pattern.permute.xlu0 0
        %575 = vperm.xlu0 %574, %v537
        %v576 = vpop.permute.xlu0 %575
        %v578 = vmul.f32 %v511, %v541
        %v579 = vmul.f32 %v513, %v546
        %v580 = vmul.f32 %v516, %v551
        %v581 = vmul.f32 %v518, %v556
        %v582 = vmul.f32 %v521, %v561
        %v583 = vmul.f32 %v523, %v566
        %v584 = vmul.f32 %v526, %v571
        %v585 = vmul.f32 %v528, %v576
        %v586 = vld [vmem:[%s357] sm:$0x1]
        %v588 = vperm.slane %v586, 0
        %v590 = vmul.f32 %v578, %v588
        %v591 = vmul.f32 %v579, %v588
        %v592 = vmul.f32 %v580, %v588
        %v593 = vmul.f32 %v581, %v588
        %v594 = vmul.f32 %v582, %v588
        %v595 = vmul.f32 %v583, %v588
        %v596 = vmul.f32 %v584, %v588
        %v597 = vmul.f32 %v585, %v588
        %s598 = smul.u32 %s24, 64
        %v599 = vlaneseq
        %v600 = vshrl.u32 %v599, 7
        %v601 = vadd.s32 %v600, 8
        %v602 = vadd.s32 %v600, 16
        %v603 = vadd.s32 %v600, 24
        %v604 = vadd.s32 %v600, 32
        %v605 = vadd.s32 %v600, 40
        %v606 = vadd.s32 %v600, 48
        %v607 = vadd.s32 %v600, 56
        %v608 = vstv %s598
        %v609 = vadd.s32 %v608, %v600
        %v610 = vadd.s32 %v608, %v601
        %v611 = vadd.s32 %v608, %v602
        %v612 = vadd.s32 %v608, %v603
        %v613 = vadd.s32 %v608, %v604
        %v614 = vadd.s32 %v608, %v605
        %v615 = vadd.s32 %v608, %v606
        %v616 = vadd.s32 %v608, %v607
        %s617 = smul.u32 %s25, 128
        %v618 = vlaneseq
        %v619 = vand.u32 %v618, 127
        %v620 = vstv %s617
        %v621 = vadd.s32 %v620, %v619
        %vm622 = vcmp.lt.s32.totalorder %v621, 16
        %v623 = vld [vmem:[%s344] sm:$0xff]
        %v624 = vld [vmem:[%s344 + $0x8] sm:$0xff]
        %v625 = vld [vmem:[%s344 + $0x10] sm:$0xff]
        %v626 = vld [vmem:[%s344 + $0x18] sm:$0xff]
        %v627 = vld [vmem:[%s344 + $0x20] sm:$0xff]
        %v628 = vld [vmem:[%s344 + $0x28] sm:$0xff]
        %v629 = vld [vmem:[%s344 + $0x30] sm:$0xff]
        %v630 = vld [vmem:[%s344 + $0x38] sm:$0xff]
        %v631 = vld [vmem:[%s348] sm:$0x1]
        %632 = vset.pattern.permute.xlu0 0
        %633 = vperm.xlu0 %632, %v623
        %v634 = vpop.permute.xlu0 %633
        %635 = vset.pattern.permute.xlu0 0
        %636 = vperm.xlu0 %635, %v624
        %v637 = vpop.permute.xlu0 %636
        %638 = vset.pattern.permute.xlu0 0
        %639 = vperm.xlu0 %638, %v625
        %v640 = vpop.permute.xlu0 %639
        %641 = vset.pattern.permute.xlu0 0
        %642 = vperm.xlu0 %641, %v626
        %v643 = vpop.permute.xlu0 %642
        %644 = vset.pattern.permute.xlu0 0
        %645 = vperm.xlu0 %644, %v627
        %v646 = vpop.permute.xlu0 %645
        %647 = vset.pattern.permute.xlu0 0
        %648 = vperm.xlu0 %647, %v628
        %v649 = vpop.permute.xlu0 %648
        %650 = vset.pattern.permute.xlu0 0
        %651 = vperm.xlu0 %650, %v629
        %v652 = vpop.permute.xlu0 %651
        %653 = vset.pattern.permute.xlu0 0
        %654 = vperm.xlu0 %653, %v630
        %v655 = vpop.permute.xlu0 %654
        %v656 = vperm.slane %v631, 0
        %vm657 = vcmp.eq.s32.totalorder %v634, %v656
        %vm658 = vcmp.eq.s32.totalorder %v637, %v656
        %vm659 = vcmp.eq.s32.totalorder %v640, %v656
        %vm660 = vcmp.eq.s32.totalorder %v643, %v656
        %vm661 = vcmp.eq.s32.totalorder %v646, %v656
        %vm662 = vcmp.eq.s32.totalorder %v649, %v656
        %vm663 = vcmp.eq.s32.totalorder %v652, %v656
        %vm664 = vcmp.eq.s32.totalorder %v655, %v656
        %v665 = vsel %vm622, 1, 0
        %vm666 = vcmp.eq.s32.totalorder %v665, 1
        %vm667 = vmand %vm657, %vm666
        %vm668 = vmand %vm658, %vm666
        %vm669 = vmand %vm659, %vm666
        %vm670 = vmand %vm660, %vm666
        %vm671 = vmand %vm661, %vm666
        %vm672 = vmand %vm662, %vm666
        %vm673 = vmand %vm663, %vm666
        %vm674 = vmand %vm664, %vm666
        %vm675 = vcmp.ne.s32.totalorder %v609, %v621
        %vm676 = vcmp.ne.s32.totalorder %v610, %v621
        %vm677 = vcmp.ne.s32.totalorder %v611, %v621
        %vm678 = vcmp.ne.s32.totalorder %v612, %v621
        %vm679 = vcmp.ne.s32.totalorder %v613, %v621
        %vm680 = vcmp.ne.s32.totalorder %v614, %v621
        %vm681 = vcmp.ne.s32.totalorder %v615, %v621
        %vm682 = vcmp.ne.s32.totalorder %v616, %v621
        %vm683 = vmand %vm667, %vm675
        %vm684 = vmand %vm668, %vm676
        %vm685 = vmand %vm669, %vm677
        %vm686 = vmand %vm670, %vm678
        %vm687 = vmand %vm671, %vm679
        %vm688 = vmand %vm672, %vm680
        %vm689 = vmand %vm673, %vm681
        %vm690 = vmand %vm674, %vm682
        %vm691 = vmxor %vm657, 1
        %vm692 = vmxor %vm658, 1
        %vm693 = vmxor %vm659, 1
        %vm694 = vmxor %vm660, 1
        %vm695 = vmxor %vm661, 1
        %vm696 = vmxor %vm662, 1
        %vm697 = vmxor %vm663, 1
        %vm698 = vmxor %vm664, 1
        %vm699 = vmand %vm691, %vm666
        %vm700 = vmand %vm692, %vm666
        %vm701 = vmand %vm693, %vm666
        %vm702 = vmand %vm694, %vm666
        %vm703 = vmand %vm695, %vm666
        %vm704 = vmand %vm696, %vm666
        %vm705 = vmand %vm697, %vm666
        %vm706 = vmand %vm698, %vm666
        %v707 = vsel %vm683, %v590, 3e+38
        %v708 = vsel %vm684, %v591, 3e+38
        %v709 = vsel %vm685, %v592, 3e+38
        %v710 = vsel %vm686, %v593, 3e+38
        %v711 = vsel %vm687, %v594, 3e+38
        %v712 = vsel %vm688, %v595, 3e+38
        %v713 = vsel %vm689, %v596, 3e+38
        %v714 = vsel %vm690, %v597, 3e+38
        %715 = vmin.xlane.f32.xlu0 %v707
        %v716 = vpop.xlane.xlu0 %715
        %717 = vmin.xlane.f32.xlu0 %v708
        %v718 = vpop.xlane.xlu0 %717
        %719 = vmin.xlane.f32.xlu0 %v709
        %v720 = vpop.xlane.xlu0 %719
        %721 = vmin.xlane.f32.xlu0 %v710
        %v722 = vpop.xlane.xlu0 %721
        %723 = vmin.xlane.f32.xlu0 %v711
        %v724 = vpop.xlane.xlu0 %723
        %725 = vmin.xlane.f32.xlu0 %v712
        %v726 = vpop.xlane.xlu0 %725
        %727 = vmin.xlane.f32.xlu0 %v713
        %v728 = vpop.xlane.xlu0 %727
        %729 = vmin.xlane.f32.xlu0 %v714
        %v730 = vpop.xlane.xlu0 %729
        %v731 = vsel %vm699, %v590, -3e+38
        %v732 = vsel %vm700, %v591, -3e+38
        %v733 = vsel %vm701, %v592, -3e+38
        %v734 = vsel %vm702, %v593, -3e+38
        %v735 = vsel %vm703, %v594, -3e+38
        %v736 = vsel %vm704, %v595, -3e+38
        %v737 = vsel %vm705, %v596, -3e+38
        %v738 = vsel %vm706, %v597, -3e+38
        %739 = vmax.xlane.f32.xlu0 %v731
        %v740 = vpop.xlane.xlu0 %739
        %741 = vmax.xlane.f32.xlu0 %v732
        %v742 = vpop.xlane.xlu0 %741
        %743 = vmax.xlane.f32.xlu0 %v733
        %v744 = vpop.xlane.xlu0 %743
        %745 = vmax.xlane.f32.xlu0 %v734
        %v746 = vpop.xlane.xlu0 %745
        %747 = vmax.xlane.f32.xlu0 %v735
        %v748 = vpop.xlane.xlu0 %747
        %749 = vmax.xlane.f32.xlu0 %v736
        %v750 = vpop.xlane.xlu0 %749
        %751 = vmax.xlane.f32.xlu0 %v737
        %v752 = vpop.xlane.xlu0 %751
        %753 = vmax.xlane.f32.xlu0 %v738
        %v754 = vpop.xlane.xlu0 %753
        %v755 = vld [vmem:[#allocation2] sm:$0xff]
        %v756 = vld [vmem:[#allocation2 + $0x8] sm:$0xff]
        %v757 = vld [vmem:[#allocation2 + $0x10] sm:$0xff]
        %v758 = vld [vmem:[#allocation2 + $0x18] sm:$0xff]
        %v759 = vld [vmem:[#allocation2 + $0x20] sm:$0xff]
        %v760 = vld [vmem:[#allocation2 + $0x28] sm:$0xff]
        %v761 = vld [vmem:[#allocation2 + $0x30] sm:$0xff]
        %v762 = vld [vmem:[#allocation2 + $0x38] sm:$0xff]
        %v763 = vmin.f32 %v755, %v716
        %v764 = vmin.f32 %v756, %v718
        %v765 = vmin.f32 %v757, %v720
        %v766 = vmin.f32 %v758, %v722
        %v767 = vmin.f32 %v759, %v724
        %v768 = vmin.f32 %v760, %v726
        %v769 = vmin.f32 %v761, %v728
        %v770 = vmin.f32 %v762, %v730
        %vm771 = vcmask 7168
        %772 = vst.msk [vmem:[#allocation2] sm:$0xff] %vm771, %v763
        %773 = vst.msk [vmem:[#allocation2 + $0x8] sm:$0xff] %vm771, %v764
        %774 = vst.msk [vmem:[#allocation2 + $0x10] sm:$0xff] %vm771, %v765
        %775 = vst.msk [vmem:[#allocation2 + $0x18] sm:$0xff] %vm771, %v766
        %776 = vst.msk [vmem:[#allocation2 + $0x20] sm:$0xff] %vm771, %v767
        %777 = vst.msk [vmem:[#allocation2 + $0x28] sm:$0xff] %vm771, %v768
        %778 = vst.msk [vmem:[#allocation2 + $0x30] sm:$0xff] %vm771, %v769
        %779 = vst.msk [vmem:[#allocation2 + $0x38] sm:$0xff] %vm771, %v770
        %v780 = vld [vmem:[#allocation3] sm:$0xff]
        %v781 = vld [vmem:[#allocation3 + $0x8] sm:$0xff]
        %v782 = vld [vmem:[#allocation3 + $0x10] sm:$0xff]
        %v783 = vld [vmem:[#allocation3 + $0x18] sm:$0xff]
        %v784 = vld [vmem:[#allocation3 + $0x20] sm:$0xff]
        %v785 = vld [vmem:[#allocation3 + $0x28] sm:$0xff]
        %v786 = vld [vmem:[#allocation3 + $0x30] sm:$0xff]
        %v787 = vld [vmem:[#allocation3 + $0x38] sm:$0xff]
        %v788 = vmax.f32 %v780, %v740
        %v789 = vmax.f32 %v781, %v742
        %v790 = vmax.f32 %v782, %v744
        %v791 = vmax.f32 %v783, %v746
        %v792 = vmax.f32 %v784, %v748
        %v793 = vmax.f32 %v785, %v750
        %v794 = vmax.f32 %v786, %v752
        %v795 = vmax.f32 %v787, %v754
        %796 = vst.msk [vmem:[#allocation3] sm:$0xff] %vm771, %v788
        %797 = vst.msk [vmem:[#allocation3 + $0x8] sm:$0xff] %vm771, %v789
        %798 = vst.msk [vmem:[#allocation3 + $0x10] sm:$0xff] %vm771, %v790
        %799 = vst.msk [vmem:[#allocation3 + $0x18] sm:$0xff] %vm771, %v791
        %800 = vst.msk [vmem:[#allocation3 + $0x20] sm:$0xff] %vm771, %v792
        %801 = vst.msk [vmem:[#allocation3 + $0x28] sm:$0xff] %vm771, %v793
        %802 = vst.msk [vmem:[#allocation3 + $0x30] sm:$0xff] %vm771, %v794
        %803 = vst.msk [vmem:[#allocation3 + $0x38] sm:$0xff] %vm771, %v795
        // Predicated region
        $region49: #{tpu_custom_call.1} parent=43 // pred_check
          %p804 = pneg %p359
        $region50: #{tpu_custom_call.1} parent=43 // pred_check_branch
          %806 = sbr.rel (%p804) target = $region52
        $region51: #{tpu_custom_call.1} parent=43 // pred_region
          %v807 = vld [vmem:[#allocation3] sm:$0xff]
          %v808 = vld [vmem:[#allocation3 + $0x8] sm:$0xff]
          %v809 = vld [vmem:[#allocation3 + $0x10] sm:$0xff]
          %v810 = vld [vmem:[#allocation3 + $0x18] sm:$0xff]
          %v811 = vld [vmem:[#allocation3 + $0x20] sm:$0xff]
          %v812 = vld [vmem:[#allocation3 + $0x28] sm:$0xff]
          %v813 = vld [vmem:[#allocation3 + $0x30] sm:$0xff]
          %v814 = vld [vmem:[#allocation3 + $0x38] sm:$0xff]
          %v815 = vld [vmem:[#allocation2] sm:$0xff]
          %v816 = vld [vmem:[#allocation2 + $0x8] sm:$0xff]
          %v817 = vld [vmem:[#allocation2 + $0x10] sm:$0xff]
          %v818 = vld [vmem:[#allocation2 + $0x18] sm:$0xff]
          %v819 = vld [vmem:[#allocation2 + $0x20] sm:$0xff]
          %v820 = vld [vmem:[#allocation2 + $0x28] sm:$0xff]
          %v821 = vld [vmem:[#allocation2 + $0x30] sm:$0xff]
          %v822 = vld [vmem:[#allocation2 + $0x38] sm:$0xff]
          %v823 = vsub.f32 %v807, %v815
          %v824 = vsub.f32 %v808, %v816
          %v825 = vsub.f32 %v809, %v817
          %v826 = vsub.f32 %v810, %v818
          %v827 = vsub.f32 %v811, %v819
          %v828 = vsub.f32 %v812, %v820
          %v829 = vsub.f32 %v813, %v821
          %v830 = vsub.f32 %v814, %v822
          %v831 = vadd.f32 %v823, 0.7
          %v832 = vadd.f32 %v824, 0.7
          %v833 = vadd.f32 %v825, 0.7
          %v834 = vadd.f32 %v826, 0.7
          %v835 = vadd.f32 %v827, 0.7
          %v836 = vadd.f32 %v828, 0.7
          %v837 = vadd.f32 %v829, 0.7
          %v838 = vadd.f32 %v830, 0.7
          %v839 = vmax.f32 %v831, 0.0
          %v840 = vmax.f32 %v832, 0.0
          %v841 = vmax.f32 %v833, 0.0
          %v842 = vmax.f32 %v834, 0.0
          %v843 = vmax.f32 %v835, 0.0
          %v844 = vmax.f32 %v836, 0.0
          %v845 = vmax.f32 %v837, 0.0
          %v846 = vmax.f32 %v838, 0.0
          %848 = vset.pattern.permute.xlu0 0
          %849 = vperm.xlu0 %848, %v839
          %v850 = vpop.permute.xlu0 %849
          %853 = vset.pattern.permute.xlu0 0
          %854 = vperm.xlu0 %853, %v840
          %v855 = vpop.permute.xlu0 %854
          %858 = vset.pattern.permute.xlu0 0
          %859 = vperm.xlu0 %858, %v841
          %v860 = vpop.permute.xlu0 %859
          %863 = vset.pattern.permute.xlu0 0
          %864 = vperm.xlu0 %863, %v842
          %v865 = vpop.permute.xlu0 %864
          %868 = vset.pattern.permute.xlu0 0
          %869 = vperm.xlu0 %868, %v843
          %v870 = vpop.permute.xlu0 %869
          %873 = vset.pattern.permute.xlu0 0
          %874 = vperm.xlu0 %873, %v844
          %v875 = vpop.permute.xlu0 %874
          %878 = vset.pattern.permute.xlu0 0
          %879 = vperm.xlu0 %878, %v845
          %v880 = vpop.permute.xlu0 %879
          %883 = vset.pattern.permute.xlu0 0
          %884 = vperm.xlu0 %883, %v846
          %v885 = vpop.permute.xlu0 %884
          %887 = vst [vmem:[%s327] sm:$0xff] %v850
          %888 = vst [vmem:[%s327 + $0x8] sm:$0xff] %v855
          %889 = vst [vmem:[%s327 + $0x10] sm:$0xff] %v860
          %890 = vst [vmem:[%s327 + $0x18] sm:$0xff] %v865
          %891 = vst [vmem:[%s327 + $0x20] sm:$0xff] %v870
          %892 = vst [vmem:[%s327 + $0x28] sm:$0xff] %v875
          %893 = vst [vmem:[%s327 + $0x30] sm:$0xff] %v880
          %894 = vst [vmem:[%s327 + $0x38] sm:$0xff] %v885
        $region52: #{tpu_custom_call.1} parent=43 // pred_fallthru
          _
        %s895 = sand.u32 %s196, 1
        %s896 = scalar_lea.sflag [#allocation5], %s895
        %s897 = sand.u32 %s196, 1
        %s898 = smul.addr %s897, 64
        %s899 = scalar_lea.vmem [#allocation4], %s898
        // Predicated region
        $region53: #{tpu_custom_call.1} parent=43 // pred_check
          %p900 = pneg %p206
        $region54: #{tpu_custom_call.1} parent=43 // pred_check_branch
          %902 = sbr.rel (%p900) target = $region56
        $region55: #{tpu_custom_call.1} parent=43 // pred_region
          %s903 = smul.u32 8, %s24
          %905 = vsyncadd %s896, 0
          %s906 = smul.addr %s903, 8
          %s907 = scalar_lea.hbm %s6, %s906
          %s908 = sshll.u32 %s899, 4
          %s909 = int_to_ptr.vmem [resolvable:$true] %s908
          %s910 = sshll.u32 %s907, 4
          %s911 = int_to_ptr.hbm [resolvable:$true] %s910
          %916 = dma.vmem_to_hbm [thread:$0]  %s909, 1024, %s911, %s896, 128, 128, 8
        $region56: #{tpu_custom_call.1} parent=43 // pred_fallthru
          _
      $region44: #{tpu_custom_call.1} parent=5 // pred_fallthru
        _
      %p917 = scmp.le.s32.totalorder 2, %s15
      // Predicated region
      $region57: #{tpu_custom_call.1} parent=5 // pred_check
        %p918 = pneg %p917
      $region58: #{tpu_custom_call.1} parent=5 // pred_check_branch
        %920 = sbr.rel (%p918) target = $region60
      $region59: #{tpu_custom_call.1} parent=5 // pred_region
        %s921 = ssub.s32 %s15, 2
        // Predicated region
        $region61: #{tpu_custom_call.1} parent=59 // pred_check
          %p922 = pneg %p212
        $region62: #{tpu_custom_call.1} parent=59 // pred_check_branch
          %924 = sbr.rel (%p922) target = $region64
        $region63: #{tpu_custom_call.1} parent=59 // pred_region
          %s925 = sand.u32 %s197, 1
          %s926 = scalar_lea.sflag [#allocation5], %s925
          %s927 = sand.u32 %s197, 1
          %s928 = smul.addr %s927, 64
          %s929 = scalar_lea.vmem [#allocation4], %s928
          %931 = dma.done %s926, 1024
        $region64: #{tpu_custom_call.1} parent=59 // pred_fallthru
          _
      $region60: #{tpu_custom_call.1} parent=5 // pred_fallthru
        _
    $region6: #{tpu_custom_call.1} parent=1 // loop_footer
      %s19 = sadd.s32 1, %s15
    $region7: #{tpu_custom_call.1} parent=1 // loop_footer_branch
      %14 = sbr.rel target = $region3
    $region8: #{tpu_custom_call.1} parent=1 // loop_exit
      _
    %932 = vsyncpa [#allocation5], 1
    %s933 = scalar_lea.sflag [#allocation5], 1
    %934 = vsyncpa %s933, 1

</llo_original>
